<compile_context>
chip_gen: v5e
topology: v5e:2x2
jax: 0.10.0
libtpu: 0.0.40
codegen_flags: <defaults>
</compile_context>

<pallas_src>
import functools

import jax
import jax.numpy as jnp
from jax.experimental import pallas as pl
from jax.experimental.pallas import tpu as pltpu


def dynamics_kernel(x_ref, wt_ref, o_ref, *, compute_dtype):
    # Cast the x tile in-kernel (no separate XLA cast pass over HBM). wt_ref
    # already holds W^T in the compute dtype -> plain MXU matmul, f32 accum.
    x = x_ref[...].astype(compute_dtype)
    o_ref[...] = jnp.dot(
        x, wt_ref[...], preferred_element_type=jnp.float32
    ).astype(o_ref.dtype)


def _pick_batch_tile(batch, b, x_itemsize, block_m=None, target_bytes=2 << 20):
    """Rows per batch tile: ~2 MiB of x per tile (>=512-row tiles reach ~85% of
    the HBM roofline), multiple of 128 when possible (8 otherwise)."""
    if batch <= 8:
        return batch  # full (tiny) array is always a legal block
    tm = block_m if block_m is not None else max(8, target_bytes // (b * x_itemsize))
    tm = min(tm, 2048, batch)
    if tm >= 128:
        tm -= tm % 128
    else:
        tm -= tm % 8
    return max(tm, 8)


def _vmem_cap_bytes():
    """Physical VMEM minus headroom for compiler-internal scratch/semaphores."""
    try:
        cap = int(pltpu.get_tpu_info().vmem_capacity_bytes)
    except Exception:  # conservative fallback = v7x's 64 MiB
        cap = 64 * 1024 * 1024
    return max(cap - 12 * 1024 * 1024, 16 * 1024 * 1024)


def prepare_dynamics_weight(weight, compute_dtype=jnp.bfloat16):
    """One-time (cacheable) prep: W^T in the MXU input dtype.

    `weight` is in nn.Linear layout (out_features, in_features). The kernel
    contracts against W^T with a standard row-major MXU matmul, so the
    transpose/cast never re-executes per call or per grid step.
    """
    return weight.T.astype(compute_dtype)


@functools.partial(
    jax.jit, static_argnames=("compute_dtype", "out_dtype", "block_m")
)
def dynamics_forward(x, w_t, *, compute_dtype=jnp.bfloat16, out_dtype=None,
                     block_m=None):
    """y = x @ W^T with W^T pre-prepared by `prepare_dynamics_weight`.

    x:   (batch, b), native dtype (cast to `compute_dtype` inside the kernel).
    w_t: (b, b) = W^T, ideally already in `compute_dtype` (cached by caller).
    """
    batch, b = x.shape
    assert w_t.shape == (b, b), (w_t.shape, b)
    out_dtype = x.dtype if out_dtype is None else out_dtype
    if w_t.dtype != jnp.dtype(compute_dtype):
        # O(b^2) safety net — callers should cache via prepare_dynamics_weight.
        w_t = w_t.astype(compute_dtype)

    x_itemsize = jnp.dtype(x.dtype).itemsize
    w_itemsize = jnp.dtype(compute_dtype).itemsize
    o_itemsize = jnp.dtype(out_dtype).itemsize

    tm = _pick_batch_tile(batch, b, x_itemsize, block_m)
    grid_m = pl.cdiv(batch, tm)  # ragged batches -> partial last block, grid kept

    # VMEM budget: weight at 2x (possible double buffer of the constant-index
    # block) + double-buffered x and y tiles.
    vmem_needed = (
        2 * b * b * w_itemsize
        + 2 * tm * b * x_itemsize
        + 2 * tm * b * o_itemsize
    )
    compiler_kwargs = dict(dimension_semantics=("parallel",))
    if vmem_needed > 12 * 1024 * 1024:  # v5e's default scoped VMEM is ~16 MiB
        compiler_kwargs["vmem_limit_bytes"] = min(
            int(1.25 * vmem_needed), _vmem_cap_bytes()
        )
    # Note: for b >= ~2048 on v7x (64 MiB VMEM) an N/K-tiled variant with an
    # f32 accumulator scratch would be required; not needed at these shapes.

    cost = pl.CostEstimate(
        flops=2 * batch * b * b,
        transcendentals=0,
        bytes_accessed=batch * b * (x_itemsize + o_itemsize) + b * b * w_itemsize,
    )

    kernel = functools.partial(dynamics_kernel, compute_dtype=compute_dtype)

    return pl.pallas_call(
        kernel,
        out_shape=jax.ShapeDtypeStruct((batch, b), out_dtype),
        grid_spec=pl.GridSpec(
            grid=(grid_m,),
            in_specs=[
                pl.BlockSpec((tm, b), lambda i: (i, 0)),  # x tile per grid step
                pl.BlockSpec((b, b), lambda i: (0, 0)),   # W^T: VMEM-resident
            ],
            out_specs=pl.BlockSpec((tm, b), lambda i: (i, 0)),
        ),
        compiler_params=pltpu.CompilerParams(**compiler_kwargs),
        cost_estimate=cost,
    )(x, w_t)


def init_dynamics_weight(key, b, init_scale):
    """Mirror of the PyTorch __init__ (deterministic, in-script)."""
    # gaussian_init_: Normal(0, std/n_units) samples of shape (b, b)
    w0 = jax.random.normal(key, (b, b), dtype=jnp.float32) * (1.0 / b)
    # torch.svd: A = U S V^T ; torch.mm(U, V.t()) == U @ Vh
    u, _, vh = jnp.linalg.svd(w0, full_matrices=False)
    return (u @ vh) * init_scale


if __name__ == "__main__":
    key = jax.random.PRNGKey(0)
    k_w, k_x = jax.random.split(key)

    # Lane-dense feature dim; batch large enough to exercise a multi-step grid.
    batch, b = 512, 128
    init_scale = 1.0

    weight = init_dynamics_weight(k_w, b, init_scale)   # nn.Linear layout
    w_t = prepare_dynamics_weight(weight)                # cached bf16 W^T
    x = jax.random.normal(k_x, (batch, b), dtype=jnp.float32)

    # 1) f32 output, small explicit tile -> 4-step pipelined grid.
    y = dynamics_forward(x, w_t, block_m=128)
    jax.block_until_ready(y)
    assert y.shape == (batch, b) and y.dtype == x.dtype

    y_ref = x @ weight.T
    assert jnp.allclose(y, y_ref, atol=5e-2, rtol=5e-2)

    # Matched-precision reference (same bf16 rounding of inputs, f32 accum).
    x_bf = x.astype(jnp.bfloat16).astype(jnp.float32)
    w_bf = weight.astype(jnp.bfloat16).astype(jnp.float32)
    assert jnp.allclose(y, x_bf @ w_bf.T, atol=5e-3, rtol=5e-3)

    # 2) Ragged batch (pl.cdiv grid / partial last block) + bf16 output knob.
    x2 = x[:300]
    y2 = dynamics_forward(x2, w_t, out_dtype=jnp.bfloat16)
    jax.block_until_ready(y2)
    assert y2.shape == (300, b) and y2.dtype == jnp.bfloat16
    assert jnp.allclose(
        y2.astype(jnp.float32), x2 @ weight.T, atol=5e-2, rtol=5e-2
    )

    print("KERNEL_OK")
</pallas_src>

<mosaic_0001>
module attributes {stable_mosaic.version = 11 : i64} {
  func.func @dynamics_kernel(%arg0: i32, %arg1: memref<128x128xf32, #tpu.memory_space<vmem>>, %arg2: memref<128x128xbf16, #tpu.memory_space<vmem>>, %arg3: memref<128x128xf32, #tpu.memory_space<vmem>>) attributes {dimension_semantics = [#tpu.dimension_semantics<parallel>], iteration_bounds = array<i64: 4>, scalar_prefetch = 0 : i64, scratch_operands = 0 : i64, tpu.core_type = #tpu.core_type<tc>, window_params = [{transform_indices = @transform_0, window_bounds = array<i64: 128, 128>}, {pipeline_mode = #tpu.pipeline_mode<synchronous>, transform_indices = @transform_1, window_bounds = array<i64: 128, 128>}, {transform_indices = @transform_2, window_bounds = array<i64: 128, 128>}]} {
    %c0 = arith.constant 0 : index
    %c0_0 = arith.constant 0 : index
    %0 = vector.load %arg1[%c0, %c0_0] : memref<128x128xf32, #tpu.memory_space<vmem>>, vector<128x128xf32>
    %1 = arith.truncf %0 : vector<128x128xf32> to vector<128x128xbf16>
    %c0_1 = arith.constant 0 : index
    %c0_2 = arith.constant 0 : index
    %2 = vector.load %arg2[%c0_1, %c0_2] : memref<128x128xbf16, #tpu.memory_space<vmem>>, vector<128x128xbf16>
    %cst = arith.constant dense<0.000000e+00> : vector<128x128xf32>
    %3 = tpu.matmul %1, %2, %cst {dimension_numbers = #tpu.dot_dimension_numbers<[1], [0], [0], [1], [0, 0, 1, 1], [], []>} : vector<128x128xbf16>, vector<128x128xbf16>, vector<128x128xf32> -> vector<128x128xf32>
    %c0_3 = arith.constant 0 : index
    %c0_4 = arith.constant 0 : index
    %4 = vector.load %arg3[%c0_3, %c0_4] : memref<128x128xf32, #tpu.memory_space<vmem>>, vector<128x128xf32>
    tpu.vector_store %arg3[%c0_3, %c0_4], %3 {strides = array<i32>} : memref<128x128xf32, #tpu.memory_space<vmem>>, vector<128x128xf32>,
    return
  }
  func.func @transform_0(%arg0: i32) -> (i32, i32) {
    %c0_i32 = arith.constant 0 : i32
    %c0_i32_0 = arith.constant 0 : i32
    return %arg0, %c0_i32 : i32, i32
  }
  func.func @transform_1(%arg0: i32) -> (i32, i32) {
    %c0_i32 = arith.constant 0 : i32
    %c0_i32_0 = arith.constant 0 : i32
    %c0_i32_1 = arith.constant 0 : i32
    return %c0_i32, %c0_i32_0 : i32, i32
  }
  func.func @transform_2(%arg0: i32) -> (i32, i32) {
    %c0_i32 = arith.constant 0 : i32
    %c0_i32_0 = arith.constant 0 : i32
    return %arg0, %c0_i32 : i32, i32
  }
}

</mosaic_0001>

<llo_original>
// kernel: dynamics_forward.1
$region0: #{dynamics_forward.1}
  #allocation0 [shape = 'u32[]', space=smem, size = 0x4, offset = 0x4, fixed_abs, tag = 'smem constant byte address 0x4 - core index']
  #allocation1 [shape = 'u32[72,128]{1,0:T(1,128)}', space=vmem, size = 0x9000, scoped, tag = 'internal scratch']
  %s0 = inlined_call_operand.hbm [shape: f32[512,128], index: 0, kind: input, shape index: {}]
  %s1 = inlined_call_operand.hbm [shape: bf16[128,128], index: 1, kind: input, shape index: {}]
  %s2 = inlined_call_operand.hbm [shape: f32[512,128], index: 2, kind: output, shape index: {}]
  %s3 = sld [smem:[#allocation0]]
  $region49: #{dynamics_forward.1} parent=0
    _
  %s5 = ssub.s32 1, %s3
  %s6 = scalar_select 0, %s5, %s3
  $region1: #{dynamics_forward.1} parent=0
    #allocation2 [shape = 'u8[131072]{0}', space=vmem, size = 0x20000, scoped, tag = 'input window, operand 0']
    #allocation3 [shape = 's32[2]{0}', space=sflag, size = 0x8, scoped, tag = 'scoped memory for dynamics_forward.1']
    #allocation4 [shape = 's32[2]{0}', space=sflag, size = 0x8, scoped, tag = 'scoped memory for dynamics_forward.1']
    #allocation5 [shape = 'u8[32768]{0}', space=vmem, size = 0x8000, scoped, tag = 'input window, operand 1, single buffered']
    #allocation6 [shape = 's32[1]{0}', space=sflag, size = 0x4, scoped, tag = 'scoped memory for dynamics_forward.1']
    #allocation7 [shape = 'u8[131072]{0}', space=vmem, size = 0x20000, scoped, tag = 'output window, operand 0']
    %7 = vsyncpa [#allocation3], 0
    %s8 = scalar_lea.sflag [#allocation3], 1
    %9 = vsyncpa %s8, 0
    %10 = vsyncpa [#allocation6], 0
    %11 = vsyncpa [#allocation4], 0
    %s12 = scalar_lea.sflag [#allocation4], 1
    %13 = vsyncpa %s12, 0
    loop: start=0, step=1, limit=6
    $region2: #{dynamics_forward.1} parent=1 // loop_pre_header
      _
    $region3: #{dynamics_forward.1} parent=1 // loop_header
      %s15 = sphi 0, %s19
      %p16 = scmp.ge.s32.totalorder %s15, 6
      %s25 = sphi 0, %s27
      %s28 = sphi 0, %s25
      %s29 = sphi 0, %s28
      %s45 = sphi 0, %s29
      %s49 = sphi 0, %s49
      %s51 = sphi 0, %s49
      %s52 = sphi 0, %s51
      %s66 = sphi 0, %s52
      %s72 = sphi 0, %s74
      %s75 = sphi 0, %s72
      %s76 = sphi 0, %s75
      %s92 = sphi 0, %s76
    $region4: #{dynamics_forward.1} parent=1 // loop_header_branch
      %18 = sbr.rel (%p16) target = $region8
    $region5: #{dynamics_forward.1} parent=1 // loop_body
      %s20 = ssub.s32 %s15, 1
      %s21 = ssub.s32 %s15, 2
      %s22 = sadd.s32 %s15, 1
      %s23 = ssub.s32 %s15, %s22
      %p24 = scmp.eq.s32.totalorder %s23, 0
      %s26 = sadd.s32 %s25, 1
      %s27 = scalar_select %p24, %s25, %s26
      %p30 = pneg %p24
      %p31 = scmp.eq.s32.totalorder %s15, 3
      %p32 = por %p30, %p31
      %p33 = scmp.ne.s32.totalorder %s25, %s28
      %p34 = scmp.eq.s32.totalorder %s15, 0
      %p35 = por %p33, %p34
      %p36 = scmp.ne.s32.totalorder %s25, %s28
      %p37 = scmp.eq.s32.totalorder %s20, 3
      %p38 = por %p36, %p37
      %p39 = scmp.ne.s32.totalorder %s28, %s29
      %p40 = scmp.eq.s32.totalorder %s20, 0
      %p41 = por %p39, %p40
      %p42 = scmp.ne.s32.totalorder %s28, %s29
      %p43 = scmp.eq.s32.totalorder %s21, 3
      %p44 = por %p42, %p43
      %p46 = scmp.ne.s32.totalorder %s29, %s45
      %p47 = scmp.eq.s32.totalorder %s21, 0
      %p48 = por %p46, %p47
      %s50 = sadd.s32 %s49, 1
      %p53 = scmp.eq.s32.totalorder %s15, 3
      %p54 = scmp.ne.s32.totalorder %s49, %s51
      %p55 = scmp.eq.s32.totalorder %s15, 0
      %p56 = por %p54, %p55
      %p57 = scmp.ne.s32.totalorder %s49, %s51
      %p58 = scmp.eq.s32.totalorder %s20, 3
      %p59 = por %p57, %p58
      %p60 = scmp.ne.s32.totalorder %s51, %s52
      %p61 = scmp.eq.s32.totalorder %s20, 0
      %p62 = por %p60, %p61
      %p63 = scmp.ne.s32.totalorder %s51, %s52
      %p64 = scmp.eq.s32.totalorder %s21, 3
      %p65 = por %p63, %p64
      %p67 = scmp.ne.s32.totalorder %s52, %s66
      %p68 = scmp.eq.s32.totalorder %s21, 0
      %p69 = por %p67, %p68
      %s70 = ssub.s32 %s15, %s22
      %p71 = scmp.eq.s32.totalorder %s70, 0
      %s73 = sadd.s32 %s72, 1
      %s74 = scalar_select %p71, %s72, %s73
      %p77 = pneg %p71
      %p78 = scmp.eq.s32.totalorder %s15, 3
      %p79 = por %p77, %p78
      %p80 = scmp.ne.s32.totalorder %s72, %s75
      %p81 = scmp.eq.s32.totalorder %s15, 0
      %p82 = por %p80, %p81
      %p83 = scmp.ne.s32.totalorder %s72, %s75
      %p84 = scmp.eq.s32.totalorder %s20, 3
      %p85 = por %p83, %p84
      %p86 = scmp.ne.s32.totalorder %s75, %s76
      %p87 = scmp.eq.s32.totalorder %s20, 0
      %p88 = por %p86, %p87
      %p89 = scmp.ne.s32.totalorder %s75, %s76
      %p90 = scmp.eq.s32.totalorder %s21, 3
      %p91 = por %p89, %p90
      %p93 = scmp.ne.s32.totalorder %s76, %s92
      %p94 = scmp.eq.s32.totalorder %s21, 0
      %p95 = por %p93, %p94
      %p96 = scmp.le.s32.totalorder 1, %s15
      %p97 = scmp.lt.s32.totalorder %s15, 5
      %p98 = pnand %p96, %p97
      %p99 = pneg %p98
      // Predicated region
      $region9: #{dynamics_forward.1} parent=5 // pred_check
        _
      $region10: #{dynamics_forward.1} parent=5 // pred_check_branch
        %101 = sbr.rel (%p98) target = $region12
      $region11: #{dynamics_forward.1} parent=5 // pred_region
        %s102 = ssub.s32 %s15, 1
        // Predicated region
        $region13: #{dynamics_forward.1} parent=11 // pred_check
          %p103 = pneg %p62
        $region14: #{dynamics_forward.1} parent=11 // pred_check_branch
          %105 = sbr.rel (%p103) target = $region16
        $region15: #{dynamics_forward.1} parent=11 // pred_region
          %107 = vsyncadd [#allocation6], 0
          %s108 = sshll.u32 %s1, 4
          %s109 = int_to_ptr.hbm [resolvable:$true] %s108
          %s110 = sshll.u32 [#allocation5], 4
          %s111 = int_to_ptr.vmem [resolvable:$true] %s110
          %116 = dma.hbm_to_vmem [thread:$0]  %s109, 1024, %s111, [#allocation6], 64, 64, 4
        $region16: #{dynamics_forward.1} parent=11 // pred_fallthru
          _
      $region12: #{dynamics_forward.1} parent=5 // pred_fallthru
        _
      %p117 = scmp.lt.s32.totalorder %s15, 4
      // Predicated region
      $region17: #{dynamics_forward.1} parent=5 // pred_check
        %p118 = pneg %p117
      $region18: #{dynamics_forward.1} parent=5 // pred_check_branch
        %120 = sbr.rel (%p118) target = $region20
      $region19: #{dynamics_forward.1} parent=5 // pred_region
        // Predicated region
        $region21: #{dynamics_forward.1} parent=19 // pred_check
          %p121 = pneg %p35
        $region22: #{dynamics_forward.1} parent=19 // pred_check_branch
          %123 = sbr.rel (%p121) target = $region24
        $region23: #{dynamics_forward.1} parent=19 // pred_region
          %s124 = sand.u32 %s25, 1
          %s125 = scalar_lea.sflag [#allocation3], %s124
          %s126 = sand.u32 %s25, 1
          %s127 = smul.addr %s126, 128
          %s128 = scalar_lea.vmem [#allocation2], %s127
          %s129 = smul.u32 16, %s15
          %131 = vsyncadd %s125, 0
          %s132 = smul.addr %s129, 8
          %s133 = scalar_lea.hbm %s0, %s132
          %s134 = sshll.u32 %s133, 4
          %s135 = int_to_ptr.hbm [resolvable:$true] %s134
          %s136 = sshll.u32 %s128, 4
          %s137 = int_to_ptr.vmem [resolvable:$true] %s136
          %142 = dma.hbm_to_vmem [thread:$0]  %s135, 2048, %s137, %s125, 128, 128, 8
        $region24: #{dynamics_forward.1} parent=19 // pred_fallthru
          _
      $region20: #{dynamics_forward.1} parent=5 // pred_fallthru
        _
      %p143 = scmp.le.s32.totalorder 1, %s15
      %p144 = scmp.lt.s32.totalorder %s15, 5
      %p145 = pnand %p143, %p144
      %p146 = pneg %p145
      // Predicated region
      $region25: #{dynamics_forward.1} parent=5 // pred_check
        _
      $region26: #{dynamics_forward.1} parent=5 // pred_check_branch
        %148 = sbr.rel (%p145) target = $region28
      $region27: #{dynamics_forward.1} parent=5 // pred_region
        %s149 = ssub.s32 %s15, 1
        %s150 = sand.u32 %s28, 1
        %s151 = scalar_lea.sflag [#allocation3], %s150
        %s152 = sand.u32 %s28, 1
        %s153 = smul.addr %s152, 128
        %s154 = scalar_lea.vmem [#allocation2], %s153
        // Predicated region
        $region29: #{dynamics_forward.1} parent=27 // pred_check
          %p155 = pneg %p41
        $region30: #{dynamics_forward.1} parent=27 // pred_check_branch
          %157 = sbr.rel (%p155) target = $region32
        $region31: #{dynamics_forward.1} parent=27 // pred_region
          %159 = dma.done %s151, 2048
        $region32: #{dynamics_forward.1} parent=27 // pred_fallthru
          _
        // Predicated region
        $region33: #{dynamics_forward.1} parent=27 // pred_check
          %p160 = pneg %p62
        $region34: #{dynamics_forward.1} parent=27 // pred_check_branch
          %162 = sbr.rel (%p160) target = $region36
        $region35: #{dynamics_forward.1} parent=27 // pred_region
          %164 = dma.done [#allocation6], 1024
        $region36: #{dynamics_forward.1} parent=27 // pred_fallthru
          _
        %s165 = sand.u32 %s28, 1
        %s166 = scalar_lea.sflag [#allocation3], %s165
        %s167 = sand.u32 %s28, 1
        %s168 = smul.addr %s167, 128
        %s169 = scalar_lea.vmem [#allocation2], %s168
        %p170 = pneg %p41
        %p171 = pneg %p38
        %p172 = pneg %p62
        %p173 = pneg %p59
        %p174 = pneg %p88
        %p175 = pneg %p85
        %s176 = sand.u32 %s75, 1
        %s177 = scalar_lea.sflag [#allocation4], %s176
        %s178 = sand.u32 %s75, 1
        %s179 = smul.addr %s178, 128
        %s180 = scalar_lea.vmem [#allocation7], %s179
        %s181 = smul.u32 16, %s20
        %s182 = smul.u32 16, %s20
        %v183 = vld [vmem:[%s154] sm:$0xff]
        %v184 = vld [vmem:[%s154 + $0x8] sm:$0xff]
        %v185 = vld [vmem:[%s154 + $0x10] sm:$0xff]
        %v186 = vld [vmem:[%s154 + $0x18] sm:$0xff]
        %v187 = vld [vmem:[%s154 + $0x20] sm:$0xff]
        %v188 = vld [vmem:[%s154 + $0x28] sm:$0xff]
        %v189 = vld [vmem:[%s154 + $0x30] sm:$0xff]
        %v190 = vld [vmem:[%s154 + $0x38] sm:$0xff]
        %v191 = vld [vmem:[%s154 + $0x40] sm:$0xff]
        %v192 = vld [vmem:[%s154 + $0x48] sm:$0xff]
        %v193 = vld [vmem:[%s154 + $0x50] sm:$0xff]
        %v194 = vld [vmem:[%s154 + $0x58] sm:$0xff]
        %v195 = vld [vmem:[%s154 + $0x60] sm:$0xff]
        %v196 = vld [vmem:[%s154 + $0x68] sm:$0xff]
        %v197 = vld [vmem:[%s154 + $0x70] sm:$0xff]
        %v198 = vld [vmem:[%s154 + $0x78] sm:$0xff]
        %v199 = vpack.c.bf16 %v184, %v183
        %v200 = vpack.c.bf16 %v186, %v185
        %v201 = vpack.c.bf16 %v188, %v187
        %v202 = vpack.c.bf16 %v190, %v189
        %v203 = vpack.c.bf16 %v192, %v191
        %v204 = vpack.c.bf16 %v194, %v193
        %v205 = vpack.c.bf16 %v196, %v195
        %v206 = vpack.c.bf16 %v198, %v197
        %v207 = vld [vmem:[#allocation5] sm:$0xf]
        %v208 = vld [vmem:[#allocation5 + $0x4] sm:$0xf]
        %v209 = vld [vmem:[#allocation5 + $0x8] sm:$0xf]
        %v210 = vld [vmem:[#allocation5 + $0xc] sm:$0xf]
        %v211 = vld [vmem:[#allocation5 + $0x10] sm:$0xf]
        %v212 = vld [vmem:[#allocation5 + $0x14] sm:$0xf]
        %v213 = vld [vmem:[#allocation5 + $0x18] sm:$0xf]
        %v214 = vld [vmem:[#allocation5 + $0x1c] sm:$0xf]
        %v215 = vld [vmem:[#allocation5 + $0x20] sm:$0xf]
        %v216 = vld [vmem:[#allocation5 + $0x24] sm:$0xf]
        %v217 = vld [vmem:[#allocation5 + $0x28] sm:$0xf]
        %v218 = vld [vmem:[#allocation5 + $0x2c] sm:$0xf]
        %v219 = vld [vmem:[#allocation5 + $0x30] sm:$0xf]
        %v220 = vld [vmem:[#allocation5 + $0x34] sm:$0xf]
        %v221 = vld [vmem:[#allocation5 + $0x38] sm:$0xf]
        %v222 = vld [vmem:[#allocation5 + $0x3c] sm:$0xf]
        %v239 = vunpack.c.l.b16 %v207
        %v240 = vunpack.c.l.b16 %v208
        %v241 = vunpack.c.l.b16 %v209
        %v242 = vunpack.c.l.b16 %v210
        %v243 = vunpack.c.l.b16 %v211
        %v244 = vunpack.c.l.b16 %v212
        %v245 = vunpack.c.l.b16 %v213
        %v246 = vunpack.c.l.b16 %v214
        %v247 = vunpack.c.l.b16 %v215
        %v248 = vunpack.c.l.b16 %v216
        %v249 = vunpack.c.l.b16 %v217
        %v250 = vunpack.c.l.b16 %v218
        %v251 = vunpack.c.l.b16 %v219
        %v252 = vunpack.c.l.b16 %v220
        %v253 = vunpack.c.l.b16 %v221
        %v254 = vunpack.c.l.b16 %v222
        %v255 = vpack.c.b16 %v240, %v239
        %v256 = vpack.c.b16 %v242, %v241
        %v257 = vpack.c.b16 %v244, %v243
        %v258 = vpack.c.b16 %v246, %v245
        %v259 = vpack.c.b16 %v248, %v247
        %v260 = vpack.c.b16 %v250, %v249
        %v261 = vpack.c.b16 %v252, %v251
        %v262 = vpack.c.b16 %v254, %v253
        %271 = vmatpush.bf16.msra.mxu0 %v262
        %272 = vmatpush.bf16.msra.mxu0 %v261
        %273 = vmatpush.bf16.msra.mxu0 %v260
        %274 = vmatpush.bf16.msra.mxu0 %v259
        %275 = vmatpush.bf16.msra.mxu0 %v258
        %276 = vmatpush.bf16.msra.mxu0 %v257
        %277 = vmatpush.bf16.msra.mxu0 %v256
        %278 = vmatpush.bf16.msra.mxu0 %v255
        %279 = vmatmul.bf16.gmra.mxu0 %v199
        %v280 = vpop.f32.mrf.mxu0
        %v281 = vadd.f32 0.0, %v280
        %v282 = vpop.f32.mrf.mxu0
        %v283 = vadd.f32 0.0, %v282
        %284 = vmatmul.bf16.gmra.mxu0 %v200
        %v285 = vpop.f32.mrf.mxu0
        %v286 = vadd.f32 0.0, %v285
        %v287 = vpop.f32.mrf.mxu0
        %v288 = vadd.f32 0.0, %v287
        %289 = vmatmul.bf16.gmra.mxu0 %v201
        %v290 = vpop.f32.mrf.mxu0
        %v291 = vadd.f32 0.0, %v290
        %v292 = vpop.f32.mrf.mxu0
        %v293 = vadd.f32 0.0, %v292
        %294 = vmatmul.bf16.gmra.mxu0 %v202
        %v295 = vpop.f32.mrf.mxu0
        %v296 = vadd.f32 0.0, %v295
        %v297 = vpop.f32.mrf.mxu0
        %v298 = vadd.f32 0.0, %v297
        %299 = vmatmul.bf16.gmra.mxu0 %v203
        %v300 = vpop.f32.mrf.mxu0
        %v301 = vadd.f32 0.0, %v300
        %v302 = vpop.f32.mrf.mxu0
        %v303 = vadd.f32 0.0, %v302
        %304 = vmatmul.bf16.gmra.mxu0 %v204
        %v305 = vpop.f32.mrf.mxu0
        %v306 = vadd.f32 0.0, %v305
        %v307 = vpop.f32.mrf.mxu0
        %v308 = vadd.f32 0.0, %v307
        %309 = vmatmul.bf16.gmra.mxu0 %v205
        %v310 = vpop.f32.mrf.mxu0
        %v311 = vadd.f32 0.0, %v310
        %v312 = vpop.f32.mrf.mxu0
        %v313 = vadd.f32 0.0, %v312
        %314 = vmatmul.bf16.gmra.mxu0 %v206
        %v315 = vpop.f32.mrf.mxu0
        %v316 = vadd.f32 0.0, %v315
        %v317 = vpop.f32.mrf.mxu0
        %v318 = vadd.f32 0.0, %v317
        %319 = vdwg.mxu0
        %320 = vst [vmem:[%s180] sm:$0xff] %v281
        %321 = vst [vmem:[%s180 + $0x8] sm:$0xff] %v283
        %322 = vst [vmem:[%s180 + $0x10] sm:$0xff] %v286
        %323 = vst [vmem:[%s180 + $0x18] sm:$0xff] %v288
        %324 = vst [vmem:[%s180 + $0x20] sm:$0xff] %v291
        %325 = vst [vmem:[%s180 + $0x28] sm:$0xff] %v293
        %326 = vst [vmem:[%s180 + $0x30] sm:$0xff] %v296
        %327 = vst [vmem:[%s180 + $0x38] sm:$0xff] %v298
        %328 = vst [vmem:[%s180 + $0x40] sm:$0xff] %v301
        %329 = vst [vmem:[%s180 + $0x48] sm:$0xff] %v303
        %330 = vst [vmem:[%s180 + $0x50] sm:$0xff] %v306
        %331 = vst [vmem:[%s180 + $0x58] sm:$0xff] %v308
        %332 = vst [vmem:[%s180 + $0x60] sm:$0xff] %v311
        %333 = vst [vmem:[%s180 + $0x68] sm:$0xff] %v313
        %334 = vst [vmem:[%s180 + $0x70] sm:$0xff] %v316
        %335 = vst [vmem:[%s180 + $0x78] sm:$0xff] %v318
        %s336 = sand.u32 %s75, 1
        %s337 = scalar_lea.sflag [#allocation4], %s336
        %s338 = sand.u32 %s75, 1
        %s339 = smul.addr %s338, 128
        %s340 = scalar_lea.vmem [#allocation7], %s339
        // Predicated region
        $region37: #{dynamics_forward.1} parent=27 // pred_check
          %p341 = pneg %p85
        $region38: #{dynamics_forward.1} parent=27 // pred_check_branch
          %343 = sbr.rel (%p341) target = $region40
        $region39: #{dynamics_forward.1} parent=27 // pred_region
          %s344 = smul.u32 16, %s20
          %346 = vsyncadd %s337, 0
          %s347 = smul.addr %s344, 8
          %s348 = scalar_lea.hbm %s2, %s347
          %s349 = sshll.u32 %s340, 4
          %s350 = int_to_ptr.vmem [resolvable:$true] %s349
          %s351 = sshll.u32 %s348, 4
          %s352 = int_to_ptr.hbm [resolvable:$true] %s351
          %357 = dma.vmem_to_hbm [thread:$0]  %s350, 2048, %s352, %s337, 128, 128, 8
        $region40: #{dynamics_forward.1} parent=27 // pred_fallthru
          _
      $region28: #{dynamics_forward.1} parent=5 // pred_fallthru
        _
      %p358 = scmp.le.s32.totalorder 2, %s15
      // Predicated region
      $region41: #{dynamics_forward.1} parent=5 // pred_check
        %p359 = pneg %p358
      $region42: #{dynamics_forward.1} parent=5 // pred_check_branch
        %361 = sbr.rel (%p359) target = $region44
      $region43: #{dynamics_forward.1} parent=5 // pred_region
        %s362 = ssub.s32 %s15, 2
        // Predicated region
        $region45: #{dynamics_forward.1} parent=43 // pred_check
          %p363 = pneg %p91
        $region46: #{dynamics_forward.1} parent=43 // pred_check_branch
          %365 = sbr.rel (%p363) target = $region48
        $region47: #{dynamics_forward.1} parent=43 // pred_region
          %s366 = sand.u32 %s76, 1
          %s367 = scalar_lea.sflag [#allocation4], %s366
          %s368 = sand.u32 %s76, 1
          %s369 = smul.addr %s368, 128
          %s370 = scalar_lea.vmem [#allocation7], %s369
          %372 = dma.done %s367, 2048
        $region48: #{dynamics_forward.1} parent=43 // pred_fallthru
          _
      $region44: #{dynamics_forward.1} parent=5 // pred_fallthru
        _
    $region6: #{dynamics_forward.1} parent=1 // loop_footer
      %s19 = sadd.s32 1, %s15
    $region7: #{dynamics_forward.1} parent=1 // loop_footer_branch
      %14 = sbr.rel target = $region3
    $region8: #{dynamics_forward.1} parent=1 // loop_exit
      _
    %373 = vsyncpa [#allocation3], 1
    %s374 = scalar_lea.sflag [#allocation3], 1
    %375 = vsyncpa %s374, 1
    %376 = vsyncpa [#allocation6], 1
    %377 = vsyncpa [#allocation4], 1
    %s378 = scalar_lea.sflag [#allocation4], 1
    %379 = vsyncpa %s378, 1

</llo_original>
